<compile_context>
chip_gen: v7x
topology: tpu7x:2x2x1
jax: 0.10.0
libtpu: 0.0.40
codegen_flags: <defaults>
</compile_context>

<pallas_src>
import math
import functools

import jax
import jax.numpy as jnp
from jax import lax
from jax.experimental import pallas as pl
from jax.experimental.pallas import tpu as pltpu


def _round_up(x, n):
    return ((x + n - 1) // n) * n


def _arcface_kernel(labels_ref, x_ref, invx_ref, w_ref, invw_ref, bias_ref,
                    loss_ref, m_ref, l_ref, coslab_ref,
                    *, s, cos_m, sin_m, th, mm, easy_margin, tile_c):
    k = pl.program_id(1)

    # ---- per-batch-tile state init (first class tile only) -------------------
    @pl.when(k == 0)
    def _init():
        m_ref[...] = jnp.full(m_ref.shape, -jnp.inf, jnp.float32)
        l_ref[...] = jnp.zeros(l_ref.shape, jnp.float32)
        coslab_ref[...] = jnp.zeros(coslab_ref.shape, jnp.float32)

    # ---- un-normalized matmul on the MXU (operands pre-cast in the wrapper) --
    # contract the feature axis directly (no transpose / relayout), f32 accum.
    dot = lax.dot_general(x_ref[...], w_ref[...], (((1,), (1,)), ((), ())),
                          preferred_element_type=jnp.float32)        # (TB, TC)

    # cosine of the angle: inverse norms are precomputed f32 and streamed.
    # NOTE: with bf16 operands |cosine| may slightly exceed 1.0; the clip in
    # the finalize sqrt keeps everything finite (benign).
    cosine = dot * invx_ref[...] * invw_ref[...]                     # (TB, TC)
    # padded class columns carry a -1e30 additive bias -> exp() underflows to 0
    logits = cosine * s + bias_ref[...]

    tb, tc = cosine.shape
    labels = labels_ref[...]                                         # (TB, 1)
    col = lax.broadcasted_iota(jnp.int32, (tb, tc), 1) + k * tile_c  # global col
    is_label = col == labels
    # exactly one class tile (the one containing the label column) adds != 0
    coslab_ref[...] += jnp.sum(jnp.where(is_label, cosine, 0.0),
                               axis=1, keepdims=True)

    # ---- online logsumexp over s*cosine (margin correction at finalize) ------
    m_prev = m_ref[...]
    m_new = jnp.maximum(m_prev, jnp.max(logits, axis=1, keepdims=True))
    alpha = jnp.exp(m_prev - m_new)
    l_ref[...] = alpha * l_ref[...] + jnp.sum(jnp.exp(logits - m_new),
                                              axis=1, keepdims=True)
    m_ref[...] = m_new

    # ---- finalize: arc-margin at the label column + per-row CE loss ----------
    @pl.when(k == pl.num_programs(1) - 1)
    def _finalize():
        cos_lab = coslab_ref[...]                                    # (TB, 1)
        sine = jnp.sqrt(jnp.clip(1.0 - cos_lab * cos_lab, 0.0, 1.0))
        phi = cos_lab * cos_m - sine * sin_m
        if easy_margin:
            phi = jnp.where(cos_lab > 0.0, phi, cos_lab)
        else:
            phi = jnp.where(cos_lab > th, phi, cos_lab - mm)
        m_fin = m_ref[...]
        # swap the label column's exp(s*cos) for exp(s*phi); phi <= cos_lab so
        # m_fin (running max of s*cosine) still bounds every term and l > 0.
        l_fin = (l_ref[...] + jnp.exp(s * phi - m_fin)
                 - jnp.exp(s * cos_lab - m_fin))
        loss_ref[...] = (m_fin + jnp.log(l_fin) - s * phi).astype(loss_ref.dtype)


def arcface_loss(inputs, labels, weight, *, s=30.0, m=0.5, easy_margin=False,
                 tile_b=256, tile_c=512, mxu_dtype=jnp.bfloat16):
    """inputs: (B, D) f32, labels: (B,) int, weight: (C, D) f32 -> scalar loss."""
    B, D = inputs.shape
    C, D_w = weight.shape
    assert D == D_w, (D, D_w)

    tile_b = min(_round_up(tile_b, 8), _round_up(B, 8))
    tile_c = min(_round_up(tile_c, 128), _round_up(C, 128))
    B_pad = _round_up(B, tile_b)
    C_pad = _round_up(C, tile_c)

    inputs_f32 = inputs.astype(jnp.float32)
    weight_f32 = weight.astype(jnp.float32)

    # F.normalize eps: 1/max(||v||, 1e-12) == rsqrt(max(sum(v*v), 1e-24)).
    inv_x = lax.rsqrt(jnp.maximum(
        jnp.sum(inputs_f32 * inputs_f32, axis=1, keepdims=True), 1e-24))   # (B,1)
    inv_w_row = lax.rsqrt(jnp.maximum(
        jnp.sum(weight_f32 * weight_f32, axis=1, keepdims=True),
        1e-24)).reshape(1, C)                                              # (1,C)

    # MXU operands, pre-cast once (bf16 halves streamed weight bytes).
    x_p = inputs.astype(mxu_dtype)
    w_p = weight.astype(mxu_dtype)
    labels_p = labels.astype(jnp.int32).reshape(B, 1)
    if B_pad != B:
        x_p = jnp.pad(x_p, ((0, B_pad - B), (0, 0)))
        inv_x = jnp.pad(inv_x, ((0, B_pad - B), (0, 0)), constant_values=1.0)
        labels_p = jnp.pad(labels_p, ((0, B_pad - B), (0, 0)))
    if C_pad != C:
        w_p = jnp.pad(w_p, ((0, C_pad - C), (0, 0)))
        inv_w_row = jnp.pad(inv_w_row, ((0, 0), (0, C_pad - C)))
    # additive bias: 0 for real classes, -1e30 for padded columns.
    bias_row = jnp.pad(jnp.zeros((1, C), jnp.float32),
                       ((0, 0), (0, C_pad - C)), constant_values=-1e30)

    kernel = functools.partial(
        _arcface_kernel,
        s=float(s), cos_m=math.cos(m), sin_m=math.sin(m),
        th=math.cos(math.pi - m), mm=math.sin(math.pi - m) * m,
        easy_margin=easy_margin, tile_c=tile_c)

    grid = (B_pad // tile_b, C_pad // tile_c)
    # TODO(synk): on v7x with B_pad // tile_b == 1 the "parallel" batch axis
    # has a single tile; splitting the class axis into two per-core partial
    # (m, l, cos_lab) accumulators would give the second TensorCore work.

    per_row = pl.pallas_call(
        kernel,
        out_shape=jax.ShapeDtypeStruct((B_pad, 1), jnp.float32),
        grid=grid,
        in_specs=[
            pl.BlockSpec((tile_b, 1), lambda i, k: (i, 0)),   # labels (resident)
            pl.BlockSpec((tile_b, D), lambda i, k: (i, 0)),   # x (mxu dtype)
            pl.BlockSpec((tile_b, 1), lambda i, k: (i, 0)),   # 1/||x||  (f32)
            pl.BlockSpec((tile_c, D), lambda i, k: (k, 0)),   # W streamed
            pl.BlockSpec((1, tile_c), lambda i, k: (0, k)),   # 1/||w||  (f32)
            pl.BlockSpec((1, tile_c), lambda i, k: (0, k)),   # pad bias (f32)
        ],
        out_specs=pl.BlockSpec((tile_b, 1), lambda i, k: (i, 0)),
        scratch_shapes=[
            pltpu.VMEM((tile_b, 1), jnp.float32),   # running max
            pltpu.VMEM((tile_b, 1), jnp.float32),   # running sum-exp
            pltpu.VMEM((tile_b, 1), jnp.float32),   # cosine at label column
        ],
        compiler_params=pltpu.CompilerParams(
            dimension_semantics=("parallel", "arbitrary")),
    )(labels_p, x_p, inv_x, w_p, inv_w_row, bias_row)

    # Tiny final reduction stays in XLA (mean over real rows only).
    return jnp.mean(per_row[:B, 0])


def _reference(inputs, labels, weight, *, s=30.0, m=0.5, easy_margin=False):
    # Pure-JAX reference mirroring the PyTorch forward.
    xn = inputs / jnp.maximum(jnp.linalg.norm(inputs, axis=1, keepdims=True), 1e-12)
    wn = weight / jnp.maximum(jnp.linalg.norm(weight, axis=1, keepdims=True), 1e-12)
    cosine = jnp.dot(xn, wn.T, precision=lax.Precision.HIGHEST)
    sine = jnp.sqrt(jnp.clip(1.0 - cosine ** 2, 0.0, 1.0))
    phi = cosine * math.cos(m) - sine * math.sin(m)
    if easy_margin:
        phi = jnp.where(cosine > 0, phi, cosine)
    else:
        phi = jnp.where(cosine > math.cos(math.pi - m),
                        phi, cosine - math.sin(math.pi - m) * m)
    one_hot = jax.nn.one_hot(labels, cosine.shape[1], dtype=cosine.dtype)
    logits = (one_hot * phi + (1.0 - one_hot) * cosine) * s
    logp = jax.nn.log_softmax(logits, axis=-1)
    return -jnp.mean(jnp.take_along_axis(logp, labels[:, None], axis=1))


if __name__ == "__main__":
    # Small shapes consistent with the module (module defaults: in=1024, out=702).
    B, IN_FEATURES, OUT_FEATURES = 16, 128, 702
    s, m = 30.0, 0.5

    key = jax.random.PRNGKey(0)
    k_x, k_w, k_lbl = jax.random.split(key, 3)

    # xavier_uniform_ for weight of shape (out_features, in_features)
    bound = math.sqrt(6.0 / (IN_FEATURES + OUT_FEATURES))
    weight = jax.random.uniform(
        k_w, (OUT_FEATURES, IN_FEATURES), jnp.float32, -bound, bound)
    inputs = jax.random.normal(k_x, (B, IN_FEATURES), jnp.float32)
    labels = jax.random.randint(k_lbl, (B,), 0, OUT_FEATURES, jnp.int32)

    ref = _reference(inputs, labels, weight, s=s, m=m, easy_margin=False)

    # f32-MXU path: close match with the PyTorch-style reference.
    loss_f32 = jax.block_until_ready(
        arcface_loss(inputs, labels, weight, s=s, m=m, easy_margin=False,
                     tile_c=256, mxu_dtype=jnp.float32))
    assert jnp.allclose(loss_f32, ref, rtol=1e-3, atol=1e-3), (loss_f32, ref)

    # bf16-MXU path (default, fast): bf16 operands, f32 accumulation / softmax.
    loss_bf16 = jax.block_until_ready(
        arcface_loss(inputs, labels, weight, s=s, m=m, easy_margin=False,
                     tile_c=256, mxu_dtype=jnp.bfloat16))
    assert jnp.allclose(loss_bf16, ref, rtol=5e-2, atol=5e-2), (loss_bf16, ref)

    print("KERNEL_OK")
</pallas_src>

<mosaic_0001>
module attributes {stable_mosaic.version = 11 : i64} {
  func.func @_arcface_kernel(%arg0: i32, %arg1: i32, %arg2: memref<16x1xi32, #tpu.memory_space<vmem>>, %arg3: memref<16x128xf32, #tpu.memory_space<vmem>>, %arg4: memref<16x1xf32, #tpu.memory_space<vmem>>, %arg5: memref<256x128xf32, #tpu.memory_space<vmem>>, %arg6: memref<1x256xf32, #tpu.memory_space<vmem>>, %arg7: memref<1x256xf32, #tpu.memory_space<vmem>>, %arg8: memref<16x1xf32, #tpu.memory_space<vmem>>, %arg9: memref<16x1xf32, #tpu.memory_space<vmem>>, %arg10: memref<16x1xf32, #tpu.memory_space<vmem>>, %arg11: memref<16x1xf32, #tpu.memory_space<vmem>>) attributes {dimension_semantics = [#tpu.dimension_semantics<parallel>, #tpu.dimension_semantics<arbitrary>], iteration_bounds = array<i64: 1, 3>, scalar_prefetch = 0 : i64, scratch_operands = 3 : i64, tpu.core_type = #tpu.core_type<tc>, window_params = [{transform_indices = @transform_0, window_bounds = array<i64: 16, 1>}, {transform_indices = @transform_1, window_bounds = array<i64: 16, 128>}, {transform_indices = @transform_2, window_bounds = array<i64: 16, 1>}, {transform_indices = @transform_3, window_bounds = array<i64: 256, 128>}, {transform_indices = @transform_4, window_bounds = array<i64: 1, 256>}, {transform_indices = @transform_5, window_bounds = array<i64: 1, 256>}, {transform_indices = @transform_6, window_bounds = array<i64: 16, 1>}]} {
    %c0_i32 = arith.constant 0 : i32
    %0 = arith.cmpi eq, %arg1, %c0_i32 : i32
    %1 = arith.extui %0 : i1 to i32
    %c0_i32_0 = arith.constant 0 : i32
    %2 = arith.cmpi ne, %1, %c0_i32_0 : i32
    scf.if %2 {
      %cst_30 = arith.constant 0xFF800000 : f32
      %50 = vector.broadcast %cst_30 : f32 to vector<16x1xf32>
      %c0_31 = arith.constant 0 : index
      %c0_32 = arith.constant 0 : index
      %51 = vector.load %arg9[%c0_31, %c0_32] : memref<16x1xf32, #tpu.memory_space<vmem>>, vector<16x1xf32>
      tpu.vector_store %arg9[%c0_31, %c0_32], %50 {strides = array<i32>} : memref<16x1xf32, #tpu.memory_space<vmem>>, vector<16x1xf32>,
      %cst_33 = arith.constant 0.000000e+00 : f32
      %52 = vector.broadcast %cst_33 : f32 to vector<16x1xf32>
      %c0_34 = arith.constant 0 : index
      %c0_35 = arith.constant 0 : index
      %53 = vector.load %arg10[%c0_34, %c0_35] : memref<16x1xf32, #tpu.memory_space<vmem>>, vector<16x1xf32>
      tpu.vector_store %arg10[%c0_34, %c0_35], %52 {strides = array<i32>} : memref<16x1xf32, #tpu.memory_space<vmem>>, vector<16x1xf32>,
      %cst_36 = arith.constant 0.000000e+00 : f32
      %54 = vector.broadcast %cst_36 : f32 to vector<16x1xf32>
      %c0_37 = arith.constant 0 : index
      %c0_38 = arith.constant 0 : index
      %55 = vector.load %arg11[%c0_37, %c0_38] : memref<16x1xf32, #tpu.memory_space<vmem>>, vector<16x1xf32>
      tpu.vector_store %arg11[%c0_37, %c0_38], %54 {strides = array<i32>} : memref<16x1xf32, #tpu.memory_space<vmem>>, vector<16x1xf32>,
    } else {
    }
    %c0 = arith.constant 0 : index
    %c0_1 = arith.constant 0 : index
    %3 = vector.load %arg3[%c0, %c0_1] : memref<16x128xf32, #tpu.memory_space<vmem>>, vector<16x128xf32>
    %c0_2 = arith.constant 0 : index
    %c0_3 = arith.constant 0 : index
    %4 = vector.load %arg5[%c0_2, %c0_3] : memref<256x128xf32, #tpu.memory_space<vmem>>, vector<256x128xf32>
    %cst = arith.constant dense<0.000000e+00> : vector<16x256xf32>
    %5 = tpu.matmul %3, %4, %cst {dimension_numbers = #tpu.dot_dimension_numbers<[1], [1], [0], [0], [0, 0, 1, 0], [], []>} : vector<16x128xf32>, vector<256x128xf32>, vector<16x256xf32> -> vector<16x256xf32>
    %c0_4 = arith.constant 0 : index
    %c0_5 = arith.constant 0 : index
    %6 = vector.load %arg4[%c0_4, %c0_5] : memref<16x1xf32, #tpu.memory_space<vmem>>, vector<16x1xf32>
    %7 = vector.broadcast %6 : vector<16x1xf32> to vector<16x256xf32>
    %8 = arith.mulf %5, %7 : vector<16x256xf32>
    %c0_6 = arith.constant 0 : index
    %c0_7 = arith.constant 0 : index
    %9 = vector.load %arg6[%c0_6, %c0_7] : memref<1x256xf32, #tpu.memory_space<vmem>>, vector<1x256xf32>
    %10 = vector.broadcast %9 : vector<1x256xf32> to vector<16x256xf32>
    %11 = arith.mulf %8, %10 : vector<16x256xf32>
    %cst_8 = arith.constant 3.000000e+01 : f32
    %12 = vector.broadcast %cst_8 : f32 to vector<16x256xf32>
    %13 = arith.mulf %11, %12 : vector<16x256xf32>
    %c0_9 = arith.constant 0 : index
    %c0_10 = arith.constant 0 : index
    %14 = vector.load %arg7[%c0_9, %c0_10] : memref<1x256xf32, #tpu.memory_space<vmem>>, vector<1x256xf32>
    %15 = vector.broadcast %14 : vector<1x256xf32> to vector<16x256xf32>
    %16 = arith.addf %13, %15 : vector<16x256xf32>
    %c0_11 = arith.constant 0 : index
    %c0_12 = arith.constant 0 : index
    %17 = vector.load %arg2[%c0_11, %c0_12] : memref<16x1xi32, #tpu.memory_space<vmem>>, vector<16x1xi32>
    %18 = tpu.iota {dimensions = array<i32: 1>} : vector<16x256xi32>
    %c256_i32 = arith.constant 256 : i32
    %19 = arith.muli %arg1, %c256_i32 : i32
    %20 = vector.broadcast %19 : i32 to vector<16x256xi32>
    %21 = arith.addi %18, %20 : vector<16x256xi32>
    %22 = vector.broadcast %17 : vector<16x1xi32> to vector<16x256xi32>
    %23 = arith.cmpi eq, %21, %22 : vector<16x256xi32>
    %c0_13 = arith.constant 0 : index
    %c0_14 = arith.constant 0 : index
    %24 = vector.load %arg11[%c0_13, %c0_14] : memref<16x1xf32, #tpu.memory_space<vmem>>, vector<16x1xf32>
    %cst_15 = arith.constant 0.000000e+00 : f32
    %25 = vector.broadcast %cst_15 : f32 to vector<16x256xf32>
    %26 = arith.select %23, %11, %25 : vector<16x256xi1>, vector<16x256xf32>
    %cst_16 = arith.constant dense<0.000000e+00> : vector<16xf32>
    %27 = vector.multi_reduction <add>, %26, %cst_16 [1] : vector<16x256xf32> to vector<16xf32>
    %28 = vector.shape_cast %27 : vector<16xf32> to vector<16x1xf32>
    %29 = arith.addf %24, %28 : vector<16x1xf32>
    %c0_17 = arith.constant 0 : index
    %c0_18 = arith.constant 0 : index
    %30 = vector.load %arg11[%c0_17, %c0_18] : memref<16x1xf32, #tpu.memory_space<vmem>>, vector<16x1xf32>
    tpu.vector_store %arg11[%c0_17, %c0_18], %29 {strides = array<i32>} : memref<16x1xf32, #tpu.memory_space<vmem>>, vector<16x1xf32>,
    %c0_19 = arith.constant 0 : index
    %c0_20 = arith.constant 0 : index
    %31 = vector.load %arg9[%c0_19, %c0_20] : memref<16x1xf32, #tpu.memory_space<vmem>>, vector<16x1xf32>
    %cst_21 = arith.constant dense<0xFF800000> : vector<16xf32>
    %32 = vector.multi_reduction <maximumf>, %16, %cst_21 [1] : vector<16x256xf32> to vector<16xf32>
    %33 = vector.shape_cast %32 : vector<16xf32> to vector<16x1xf32>
    %34 = arith.maximumf %31, %33 : vector<16x1xf32>
    %35 = arith.subf %31, %34 : vector<16x1xf32>
    %36 = math.exp %35 : vector<16x1xf32>
    %c0_22 = arith.constant 0 : index
    %c0_23 = arith.constant 0 : index
    %37 = vector.load %arg10[%c0_22, %c0_23] : memref<16x1xf32, #tpu.memory_space<vmem>>, vector<16x1xf32>
    %38 = arith.mulf %36, %37 : vector<16x1xf32>
    %39 = vector.broadcast %34 : vector<16x1xf32> to vector<16x256xf32>
    %40 = arith.subf %16, %39 : vector<16x256xf32>
    %41 = math.exp %40 : vector<16x256xf32>
    %cst_24 = arith.constant dense<0.000000e+00> : vector<16xf32>
    %42 = vector.multi_reduction <add>, %41, %cst_24 [1] : vector<16x256xf32> to vector<16xf32>
    %43 = vector.shape_cast %42 : vector<16xf32> to vector<16x1xf32>
    %44 = arith.addf %38, %43 : vector<16x1xf32>
    %c0_25 = arith.constant 0 : index
    %c0_26 = arith.constant 0 : index
    %45 = vector.load %arg10[%c0_25, %c0_26] : memref<16x1xf32, #tpu.memory_space<vmem>>, vector<16x1xf32>
    tpu.vector_store %arg10[%c0_25, %c0_26], %44 {strides = array<i32>} : memref<16x1xf32, #tpu.memory_space<vmem>>, vector<16x1xf32>,
    %c0_27 = arith.constant 0 : index
    %c0_28 = arith.constant 0 : index
    %46 = vector.load %arg9[%c0_27, %c0_28] : memref<16x1xf32, #tpu.memory_space<vmem>>, vector<16x1xf32>
    tpu.vector_store %arg9[%c0_27, %c0_28], %34 {strides = array<i32>} : memref<16x1xf32, #tpu.memory_space<vmem>>, vector<16x1xf32>,
    %c2_i32 = arith.constant 2 : i32
    %47 = arith.cmpi eq, %arg1, %c2_i32 : i32
    %48 = arith.extui %47 : i1 to i32
    %c0_i32_29 = arith.constant 0 : i32
    %49 = arith.cmpi ne, %48, %c0_i32_29 : i32
    scf.if %49 {
      %c0_30 = arith.constant 0 : index
      %c0_31 = arith.constant 0 : index
      %50 = vector.load %arg11[%c0_30, %c0_31] : memref<16x1xf32, #tpu.memory_space<vmem>>, vector<16x1xf32>
      %51 = arith.mulf %50, %50 : vector<16x1xf32>
      %cst_32 = arith.constant 1.000000e+00 : f32
      %52 = vector.broadcast %cst_32 : f32 to vector<16x1xf32>
      %53 = arith.subf %52, %51 : vector<16x1xf32>
      %cst_33 = arith.constant 0.000000e+00 : f32
      %cst_34 = arith.constant 1.000000e+00 : f32
      %54 = vector.broadcast %cst_33 : f32 to vector<16x1xf32>
      %55 = arith.maximumf %54, %53 : vector<16x1xf32>
      %56 = vector.broadcast %cst_34 : f32 to vector<16x1xf32>
      %57 = arith.minimumf %56, %55 : vector<16x1xf32>
      %58 = math.sqrt %57 : vector<16x1xf32>
      %cst_35 = arith.constant 0.87758255 : f32
      %59 = vector.broadcast %cst_35 : f32 to vector<16x1xf32>
      %60 = arith.mulf %50, %59 : vector<16x1xf32>
      %cst_36 = arith.constant 0.47942555 : f32
      %61 = vector.broadcast %cst_36 : f32 to vector<16x1xf32>
      %62 = arith.mulf %58, %61 : vector<16x1xf32>
      %63 = arith.subf %60, %62 : vector<16x1xf32>
      %cst_37 = arith.constant -0.87758255 : f32
      %64 = vector.broadcast %cst_37 : f32 to vector<16x1xf32>
      %65 = arith.cmpf ogt, %50, %64 : vector<16x1xf32>
      %cst_38 = arith.constant 0.239712775 : f32
      %66 = vector.broadcast %cst_38 : f32 to vector<16x1xf32>
      %67 = arith.subf %50, %66 : vector<16x1xf32>
      %68 = arith.select %65, %63, %67 : vector<16x1xi1>, vector<16x1xf32>
      %c0_39 = arith.constant 0 : index
      %c0_40 = arith.constant 0 : index
      %69 = vector.load %arg9[%c0_39, %c0_40] : memref<16x1xf32, #tpu.memory_space<vmem>>, vector<16x1xf32>
      %c0_41 = arith.constant 0 : index
      %c0_42 = arith.constant 0 : index
      %70 = vector.load %arg10[%c0_41, %c0_42] : memref<16x1xf32, #tpu.memory_space<vmem>>, vector<16x1xf32>
      %cst_43 = arith.constant 3.000000e+01 : f32
      %71 = vector.broadcast %cst_43 : f32 to vector<16x1xf32>
      %72 = arith.mulf %71, %68 : vector<16x1xf32>
      %73 = arith.subf %72, %69 : vector<16x1xf32>
      %74 = math.exp %73 : vector<16x1xf32>
      %75 = arith.addf %70, %74 : vector<16x1xf32>
      %cst_44 = arith.constant 3.000000e+01 : f32
      %76 = vector.broadcast %cst_44 : f32 to vector<16x1xf32>
      %77 = arith.mulf %76, %50 : vector<16x1xf32>
      %78 = arith.subf %77, %69 : vector<16x1xf32>
      %79 = math.exp %78 : vector<16x1xf32>
      %80 = arith.subf %75, %79 : vector<16x1xf32>
      %81 = math.log %80 : vector<16x1xf32>
      %82 = arith.addf %69, %81 : vector<16x1xf32>
      %cst_45 = arith.constant 3.000000e+01 : f32
      %83 = vector.broadcast %cst_45 : f32 to vector<16x1xf32>
      %84 = arith.mulf %83, %68 : vector<16x1xf32>
      %85 = arith.subf %82, %84 : vector<16x1xf32>
      %c0_46 = arith.constant 0 : index
      %c0_47 = arith.constant 0 : index
      %86 = vector.load %arg8[%c0_46, %c0_47] : memref<16x1xf32, #tpu.memory_space<vmem>>, vector<16x1xf32>
      tpu.vector_store %arg8[%c0_46, %c0_47], %85 {strides = array<i32>} : memref<16x1xf32, #tpu.memory_space<vmem>>, vector<16x1xf32>,
    } else {
    }
    return
  }
  func.func @transform_0(%arg0: i32, %arg1: i32) -> (i32, i32) {
    %c0_i32 = arith.constant 0 : i32
    %c0_i32_0 = arith.constant 0 : i32
    return %arg0, %c0_i32 : i32, i32
  }
  func.func @transform_1(%arg0: i32, %arg1: i32) -> (i32, i32) {
    %c0_i32 = arith.constant 0 : i32
    %c0_i32_0 = arith.constant 0 : i32
    return %arg0, %c0_i32 : i32, i32
  }
  func.func @transform_2(%arg0: i32, %arg1: i32) -> (i32, i32) {
    %c0_i32 = arith.constant 0 : i32
    %c0_i32_0 = arith.constant 0 : i32
    return %arg0, %c0_i32 : i32, i32
  }
  func.func @transform_3(%arg0: i32, %arg1: i32) -> (i32, i32) {
    %c0_i32 = arith.constant 0 : i32
    %c0_i32_0 = arith.constant 0 : i32
    return %arg1, %c0_i32 : i32, i32
  }
  func.func @transform_4(%arg0: i32, %arg1: i32) -> (i32, i32) {
    %c0_i32 = arith.constant 0 : i32
    %c0_i32_0 = arith.constant 0 : i32
    return %c0_i32, %arg1 : i32, i32
  }
  func.func @transform_5(%arg0: i32, %arg1: i32) -> (i32, i32) {
    %c0_i32 = arith.constant 0 : i32
    %c0_i32_0 = arith.constant 0 : i32
    return %c0_i32, %arg1 : i32, i32
  }
  func.func @transform_6(%arg0: i32, %arg1: i32) -> (i32, i32) {
    %c0_i32 = arith.constant 0 : i32
    %c0_i32_0 = arith.constant 0 : i32
    return %arg0, %c0_i32 : i32, i32
  }
}

</mosaic_0001>

<llo_original>
// kernel: tpu_custom_call.1
$region0: #{tpu_custom_call.1}
  #allocation0 [shape = 'u32[]', space=smem, size = 0x4, offset = 0x4, fixed_abs, tag = 'smem constant byte address 0x4 - core index']
  #allocation1 [shape = 'u32[144,128]{1,0:T(1,128)}', space=vmem, size = 0x12000, scoped, tag = 'internal scratch']
  #allocation2 [shape = 'f32[16,1]{1,0:T(8,128)}', space=vmem, size = 0x2000, scoped, tag = 'scratch operand']
  #allocation3 [shape = 'f32[16,1]{1,0:T(8,128)}', space=vmem, size = 0x2000, scoped, tag = 'scratch operand']
  #allocation4 [shape = 'f32[16,1]{1,0:T(8,128)}', space=vmem, size = 0x2000, scoped, tag = 'scratch operand']
  %s0 = inlined_call_operand.vmem [shape: s32[16,1], index: 0, kind: input, shape index: {}]
  %s1 = inlined_call_operand.vmem [shape: f32[16,128], index: 1, kind: input, shape index: {}]
  %s2 = inlined_call_operand.vmem [shape: f32[16,1], index: 2, kind: input, shape index: {}]
  %s3 = inlined_call_operand.hbm [shape: f32[768,128], index: 3, kind: input, shape index: {}]
  %s4 = inlined_call_operand.vmem [shape: f32[1,768], index: 4, kind: input, shape index: {}]
  %s5 = inlined_call_operand.vmem [shape: f32[1,768], index: 5, kind: input, shape index: {}]
  %s6 = inlined_call_operand.vmem [shape: f32[16,1], index: 6, kind: output, shape index: {}]
  %s7 = sld [smem:[#allocation0]]
  $region69: #{tpu_custom_call.1} parent=0
    _
  %s9 = ssub.s32 1, %s7
  %s10 = scalar_select 0, %s9, %s7
  $region1: #{tpu_custom_call.1} parent=0
    #allocation5 [shape = 'u8[262144]{0}', space=vmem, size = 0x40000, scoped, tag = 'input window, operand 3']
    #allocation6 [shape = 's32[2]{0}', space=sflag, size = 0x8, scoped, tag = 'scoped memory for tpu_custom_call.1']
    %11 = vsyncpa [#allocation6], 0
    %s12 = scalar_lea.sflag [#allocation6], 1
    %13 = vsyncpa %s12, 0
    loop: start=0, step=1, limit=5
    $region2: #{tpu_custom_call.1} parent=1 // loop_pre_header
      _
    $region3: #{tpu_custom_call.1} parent=1 // loop_header
      %s15 = sphi 0, %s19
      %p16 = scmp.ge.s32.totalorder %s15, 5
      %s22 = sphi 0, %s34
      %s23 = sphi 0, %s30
      %s24 = sphi 0, %s22
      %s25 = sphi 0, %s23
      %s26 = sphi 0, %s24
      %s27 = sphi 0, %s25
      %s37 = sphi 0, %s39
      %s40 = sphi 0, %s37
      %s41 = sphi 0, %s40
      %s57 = sphi 0, %s41
      %s63 = sphi 0, %s65
      %s66 = sphi 0, %s63
      %s67 = sphi 0, %s66
      %s83 = sphi 0, %s67
      %s89 = sphi 0, %s91
      %s92 = sphi 0, %s89
      %s93 = sphi 0, %s92
      %s109 = sphi 0, %s93
      %s115 = sphi 0, %s117
      %s118 = sphi 0, %s115
      %s119 = sphi 0, %s118
      %s135 = sphi 0, %s119
      %s141 = sphi 0, %s143
      %s144 = sphi 0, %s141
      %s145 = sphi 0, %s144
      %s161 = sphi 0, %s145
      %s167 = sphi 0, %s169
      %s170 = sphi 0, %s167
      %s171 = sphi 0, %s170
      %s187 = sphi 0, %s171
      %s193 = sphi 0, %s195
      %s196 = sphi 0, %s193
      %s197 = sphi 0, %s196
      %s213 = sphi 0, %s197
    $region4: #{tpu_custom_call.1} parent=1 // loop_header_branch
      %18 = sbr.rel (%p16) target = $region8
    $region5: #{tpu_custom_call.1} parent=1 // loop_body
      %s20 = ssub.s32 %s15, 1
      %s21 = ssub.s32 %s15, 2
      %s28 = sadd.s32 1, %s23
      %p29 = scmp.ge.s32.totalorder %s28, 3
      %s30 = scalar_select %p29, 0, %s28
      %s31 = sadd.s32 1, %s22
      %s32 = scalar_select %p29, %s31, %s22
      %p33 = scmp.ge.s32.totalorder %s32, 1
      %s34 = scalar_select %p33, 0, %s32
      %s35 = ssub.s32 %s22, %s34
      %p36 = scmp.eq.s32.totalorder %s35, 0
      %s38 = sadd.s32 %s37, 1
      %s39 = scalar_select %p36, %s37, %s38
      %p42 = pneg %p36
      %p43 = scmp.eq.s32.totalorder %s15, 2
      %p44 = por %p42, %p43
      %p45 = scmp.ne.s32.totalorder %s37, %s40
      %p46 = scmp.eq.s32.totalorder %s15, 0
      %p47 = por %p45, %p46
      %p48 = scmp.ne.s32.totalorder %s37, %s40
      %p49 = scmp.eq.s32.totalorder %s20, 2
      %p50 = por %p48, %p49
      %p51 = scmp.ne.s32.totalorder %s40, %s41
      %p52 = scmp.eq.s32.totalorder %s20, 0
      %p53 = por %p51, %p52
      %p54 = scmp.ne.s32.totalorder %s40, %s41
      %p55 = scmp.eq.s32.totalorder %s21, 2
      %p56 = por %p54, %p55
      %p58 = scmp.ne.s32.totalorder %s41, %s57
      %p59 = scmp.eq.s32.totalorder %s21, 0
      %p60 = por %p58, %p59
      %s61 = ssub.s32 %s22, %s34
      %p62 = scmp.eq.s32.totalorder %s61, 0
      %s64 = sadd.s32 %s63, 1
      %s65 = scalar_select %p62, %s63, %s64
      %p68 = pneg %p62
      %p69 = scmp.eq.s32.totalorder %s15, 2
      %p70 = por %p68, %p69
      %p71 = scmp.ne.s32.totalorder %s63, %s66
      %p72 = scmp.eq.s32.totalorder %s15, 0
      %p73 = por %p71, %p72
      %p74 = scmp.ne.s32.totalorder %s63, %s66
      %p75 = scmp.eq.s32.totalorder %s20, 2
      %p76 = por %p74, %p75
      %p77 = scmp.ne.s32.totalorder %s66, %s67
      %p78 = scmp.eq.s32.totalorder %s20, 0
      %p79 = por %p77, %p78
      %p80 = scmp.ne.s32.totalorder %s66, %s67
      %p81 = scmp.eq.s32.totalorder %s21, 2
      %p82 = por %p80, %p81
      %p84 = scmp.ne.s32.totalorder %s67, %s83
      %p85 = scmp.eq.s32.totalorder %s21, 0
      %p86 = por %p84, %p85
      %s87 = ssub.s32 %s22, %s34
      %p88 = scmp.eq.s32.totalorder %s87, 0
      %s90 = sadd.s32 %s89, 1
      %s91 = scalar_select %p88, %s89, %s90
      %p94 = pneg %p88
      %p95 = scmp.eq.s32.totalorder %s15, 2
      %p96 = por %p94, %p95
      %p97 = scmp.ne.s32.totalorder %s89, %s92
      %p98 = scmp.eq.s32.totalorder %s15, 0
      %p99 = por %p97, %p98
      %p100 = scmp.ne.s32.totalorder %s89, %s92
      %p101 = scmp.eq.s32.totalorder %s20, 2
      %p102 = por %p100, %p101
      %p103 = scmp.ne.s32.totalorder %s92, %s93
      %p104 = scmp.eq.s32.totalorder %s20, 0
      %p105 = por %p103, %p104
      %p106 = scmp.ne.s32.totalorder %s92, %s93
      %p107 = scmp.eq.s32.totalorder %s21, 2
      %p108 = por %p106, %p107
      %p110 = scmp.ne.s32.totalorder %s93, %s109
      %p111 = scmp.eq.s32.totalorder %s21, 0
      %p112 = por %p110, %p111
      %s113 = ssub.s32 %s23, %s30
      %p114 = scmp.eq.s32.totalorder %s113, 0
      %s116 = sadd.s32 %s115, 1
      %s117 = scalar_select %p114, %s115, %s116
      %p120 = pneg %p114
      %p121 = scmp.eq.s32.totalorder %s15, 2
      %p122 = por %p120, %p121
      %p123 = scmp.ne.s32.totalorder %s115, %s118
      %p124 = scmp.eq.s32.totalorder %s15, 0
      %p125 = por %p123, %p124
      %p126 = scmp.ne.s32.totalorder %s115, %s118
      %p127 = scmp.eq.s32.totalorder %s20, 2
      %p128 = por %p126, %p127
      %p129 = scmp.ne.s32.totalorder %s118, %s119
      %p130 = scmp.eq.s32.totalorder %s20, 0
      %p131 = por %p129, %p130
      %p132 = scmp.ne.s32.totalorder %s118, %s119
      %p133 = scmp.eq.s32.totalorder %s21, 2
      %p134 = por %p132, %p133
      %p136 = scmp.ne.s32.totalorder %s119, %s135
      %p137 = scmp.eq.s32.totalorder %s21, 0
      %p138 = por %p136, %p137
      %s139 = ssub.s32 %s23, %s30
      %p140 = scmp.eq.s32.totalorder %s139, 0
      %s142 = sadd.s32 %s141, 1
      %s143 = scalar_select %p140, %s141, %s142
      %p146 = pneg %p140
      %p147 = scmp.eq.s32.totalorder %s15, 2
      %p148 = por %p146, %p147
      %p149 = scmp.ne.s32.totalorder %s141, %s144
      %p150 = scmp.eq.s32.totalorder %s15, 0
      %p151 = por %p149, %p150
      %p152 = scmp.ne.s32.totalorder %s141, %s144
      %p153 = scmp.eq.s32.totalorder %s20, 2
      %p154 = por %p152, %p153
      %p155 = scmp.ne.s32.totalorder %s144, %s145
      %p156 = scmp.eq.s32.totalorder %s20, 0
      %p157 = por %p155, %p156
      %p158 = scmp.ne.s32.totalorder %s144, %s145
      %p159 = scmp.eq.s32.totalorder %s21, 2
      %p160 = por %p158, %p159
      %p162 = scmp.ne.s32.totalorder %s145, %s161
      %p163 = scmp.eq.s32.totalorder %s21, 0
      %p164 = por %p162, %p163
      %s165 = ssub.s32 %s23, %s30
      %p166 = scmp.eq.s32.totalorder %s165, 0
      %s168 = sadd.s32 %s167, 1
      %s169 = scalar_select %p166, %s167, %s168
      %p172 = pneg %p166
      %p173 = scmp.eq.s32.totalorder %s15, 2
      %p174 = por %p172, %p173
      %p175 = scmp.ne.s32.totalorder %s167, %s170
      %p176 = scmp.eq.s32.totalorder %s15, 0
      %p177 = por %p175, %p176
      %p178 = scmp.ne.s32.totalorder %s167, %s170
      %p179 = scmp.eq.s32.totalorder %s20, 2
      %p180 = por %p178, %p179
      %p181 = scmp.ne.s32.totalorder %s170, %s171
      %p182 = scmp.eq.s32.totalorder %s20, 0
      %p183 = por %p181, %p182
      %p184 = scmp.ne.s32.totalorder %s170, %s171
      %p185 = scmp.eq.s32.totalorder %s21, 2
      %p186 = por %p184, %p185
      %p188 = scmp.ne.s32.totalorder %s171, %s187
      %p189 = scmp.eq.s32.totalorder %s21, 0
      %p190 = por %p188, %p189
      %s191 = ssub.s32 %s22, %s34
      %p192 = scmp.eq.s32.totalorder %s191, 0
      %s194 = sadd.s32 %s193, 1
      %s195 = scalar_select %p192, %s193, %s194
      %p198 = pneg %p192
      %p199 = scmp.eq.s32.totalorder %s15, 2
      %p200 = por %p198, %p199
      %p201 = scmp.ne.s32.totalorder %s193, %s196
      %p202 = scmp.eq.s32.totalorder %s15, 0
      %p203 = por %p201, %p202
      %p204 = scmp.ne.s32.totalorder %s193, %s196
      %p205 = scmp.eq.s32.totalorder %s20, 2
      %p206 = por %p204, %p205
      %p207 = scmp.ne.s32.totalorder %s196, %s197
      %p208 = scmp.eq.s32.totalorder %s20, 0
      %p209 = por %p207, %p208
      %p210 = scmp.ne.s32.totalorder %s196, %s197
      %p211 = scmp.eq.s32.totalorder %s21, 2
      %p212 = por %p210, %p211
      %p214 = scmp.ne.s32.totalorder %s197, %s213
      %p215 = scmp.eq.s32.totalorder %s21, 0
      %p216 = por %p214, %p215
      %p217 = scmp.le.s32.totalorder 1, %s15
      %p218 = scmp.lt.s32.totalorder %s15, 4
      %p219 = pnand %p217, %p218
      %p220 = pneg %p219
      // Predicated region
      $region9: #{tpu_custom_call.1} parent=5 // pred_check
        _
      $region10: #{tpu_custom_call.1} parent=5 // pred_check_branch
        %222 = sbr.rel (%p219) target = $region12
      $region11: #{tpu_custom_call.1} parent=5 // pred_region
        %s223 = ssub.s32 %s15, 1
        // Predicated region
        $region13: #{tpu_custom_call.1} parent=11 // pred_check
          %p224 = pneg %p53
        $region14: #{tpu_custom_call.1} parent=11 // pred_check_branch
          %226 = sbr.rel (%p224) target = $region16
        $region15: #{tpu_custom_call.1} parent=11 // pred_region
          %s227 = smul.u32 2, %s24
          %p228 = scmp.lt.s32.totalorder %s227, 1
          %s229 = scalar_select %p228, %s227, 1
          %s230 = smul.addr %s229, 8
          %s231 = scalar_lea.vmem %s0, %s230
          %s232 = smul.u32 2, %s24
        $region16: #{tpu_custom_call.1} parent=11 // pred_fallthru
          _
        // Predicated region
        $region17: #{tpu_custom_call.1} parent=11 // pred_check
          %p233 = pneg %p79
        $region18: #{tpu_custom_call.1} parent=11 // pred_check_branch
          %235 = sbr.rel (%p233) target = $region20
        $region19: #{tpu_custom_call.1} parent=11 // pred_region
          %s236 = smul.u32 2, %s24
          %p237 = scmp.lt.s32.totalorder %s236, 1
          %s238 = scalar_select %p237, %s236, 1
          %s239 = smul.addr %s238, 8
          %s240 = scalar_lea.vmem %s1, %s239
          %s241 = smul.u32 2, %s24
        $region20: #{tpu_custom_call.1} parent=11 // pred_fallthru
          _
        // Predicated region
        $region21: #{tpu_custom_call.1} parent=11 // pred_check
          %p242 = pneg %p105
        $region22: #{tpu_custom_call.1} parent=11 // pred_check_branch
          %244 = sbr.rel (%p242) target = $region24
        $region23: #{tpu_custom_call.1} parent=11 // pred_region
          %s245 = smul.u32 2, %s24
          %p246 = scmp.lt.s32.totalorder %s245, 1
          %s247 = scalar_select %p246, %s245, 1
          %s248 = smul.addr %s247, 8
          %s249 = scalar_lea.vmem %s2, %s248
          %s250 = smul.u32 2, %s24
        $region24: #{tpu_custom_call.1} parent=11 // pred_fallthru
          _
      $region12: #{tpu_custom_call.1} parent=5 // pred_fallthru
        _
      %p251 = scmp.lt.s32.totalorder %s15, 3
      // Predicated region
      $region25: #{tpu_custom_call.1} parent=5 // pred_check
        %p252 = pneg %p251
      $region26: #{tpu_custom_call.1} parent=5 // pred_check_branch
        %254 = sbr.rel (%p252) target = $region28
      $region27: #{tpu_custom_call.1} parent=5 // pred_region
        // Predicated region
        $region29: #{tpu_custom_call.1} parent=27 // pred_check
          %p255 = pneg %p125
        $region30: #{tpu_custom_call.1} parent=27 // pred_check_branch
          %257 = sbr.rel (%p255) target = $region32
        $region31: #{tpu_custom_call.1} parent=27 // pred_region
          %s258 = sand.u32 %s115, 1
          %s259 = scalar_lea.sflag [#allocation6], %s258
          %s260 = sand.u32 %s115, 1
          %s261 = smul.addr %s260, 256
          %s262 = scalar_lea.vmem [#allocation5], %s261
          %s263 = smul.u32 32, %s23
          %s265 = ssub.s32 4096, 4096
          %266 = vsyncadd %s259, %s265
          %s267 = smul.addr %s263, 128
          %s268 = scalar_lea.hbm %s3, %s267
          %s269 = sshll.u32 %s262, 4
          %s270 = int_to_ptr.vmem [resolvable:$true] %s269
          %275 = dma.hbm_to_vmem [thread:$0]  %s268, 4096, %s270, %s259, 128, 128, 8
        $region32: #{tpu_custom_call.1} parent=27 // pred_fallthru
          _
        // Predicated region
        $region33: #{tpu_custom_call.1} parent=27 // pred_check
          %p276 = pneg %p151
        $region34: #{tpu_custom_call.1} parent=27 // pred_check_branch
          %278 = sbr.rel (%p276) target = $region36
        $region35: #{tpu_custom_call.1} parent=27 // pred_region
          %s279 = smul.u32 2, %s23
          %p280 = scmp.lt.s32.totalorder %s279, 5
          %s281 = scalar_select %p280, %s279, 5
          %s282 = scalar_lea.vmem %s4, %s281
          %s283 = smul.u32 2, %s23
        $region36: #{tpu_custom_call.1} parent=27 // pred_fallthru
          _
        // Predicated region
        $region37: #{tpu_custom_call.1} parent=27 // pred_check
          %p284 = pneg %p177
        $region38: #{tpu_custom_call.1} parent=27 // pred_check_branch
          %286 = sbr.rel (%p284) target = $region40
        $region39: #{tpu_custom_call.1} parent=27 // pred_region
          %s287 = smul.u32 2, %s23
          %p288 = scmp.lt.s32.totalorder %s287, 5
          %s289 = scalar_select %p288, %s287, 5
          %s290 = scalar_lea.vmem %s5, %s289
          %s291 = smul.u32 2, %s23
        $region40: #{tpu_custom_call.1} parent=27 // pred_fallthru
          _
      $region28: #{tpu_custom_call.1} parent=5 // pred_fallthru
        _
      %p292 = scmp.le.s32.totalorder 1, %s15
      %p293 = scmp.lt.s32.totalorder %s15, 4
      %p294 = pnand %p292, %p293
      %p295 = pneg %p294
      // Predicated region
      $region41: #{tpu_custom_call.1} parent=5 // pred_check
        _
      $region42: #{tpu_custom_call.1} parent=5 // pred_check_branch
        %297 = sbr.rel (%p294) target = $region44
      $region43: #{tpu_custom_call.1} parent=5 // pred_region
        %s298 = ssub.s32 %s15, 1
        %s299 = sand.u32 %s118, 1
        %s300 = scalar_lea.sflag [#allocation6], %s299
        %s301 = sand.u32 %s118, 1
        %s302 = smul.addr %s301, 256
        %s303 = scalar_lea.vmem [#allocation5], %s302
        // Predicated region
        $region45: #{tpu_custom_call.1} parent=43 // pred_check
          %p304 = pneg %p131
        $region46: #{tpu_custom_call.1} parent=43 // pred_check_branch
          %306 = sbr.rel (%p304) target = $region48
        $region47: #{tpu_custom_call.1} parent=43 // pred_region
          %307 = dma.done %s300, 4096
        $region48: #{tpu_custom_call.1} parent=43 // pred_fallthru
          _
        %s308 = smul.u32 2, %s24
        %p309 = scmp.lt.s32.totalorder %s308, 1
        %s310 = scalar_select %p309, %s308, 1
        %s311 = smul.addr %s310, 8
        %s312 = scalar_lea.vmem %s0, %s311
        %p313 = pneg %p53
        %p314 = pneg %p50
        %s315 = smul.u32 2, %s24
        %p316 = scmp.lt.s32.totalorder %s315, 1
        %s317 = scalar_select %p316, %s315, 1
        %s318 = smul.addr %s317, 8
        %s319 = scalar_lea.vmem %s1, %s318
        %p320 = pneg %p79
        %p321 = pneg %p76
        %s322 = smul.u32 2, %s24
        %p323 = scmp.lt.s32.totalorder %s322, 1
        %s324 = scalar_select %p323, %s322, 1
        %s325 = smul.addr %s324, 8
        %s326 = scalar_lea.vmem %s2, %s325
        %p327 = pneg %p105
        %p328 = pneg %p102
        %s329 = sand.u32 %s118, 1
        %s330 = scalar_lea.sflag [#allocation6], %s329
        %s331 = sand.u32 %s118, 1
        %s332 = smul.addr %s331, 256
        %s333 = scalar_lea.vmem [#allocation5], %s332
        %p334 = pneg %p131
        %p335 = pneg %p128
        %s336 = smul.u32 2, %s25
        %p337 = scmp.lt.s32.totalorder %s336, 5
        %s338 = scalar_select %p337, %s336, 5
        %s339 = scalar_lea.vmem %s4, %s338
        %p340 = pneg %p157
        %p341 = pneg %p154
        %s342 = smul.u32 2, %s25
        %p343 = scmp.lt.s32.totalorder %s342, 5
        %s344 = scalar_select %p343, %s342, 5
        %s345 = scalar_lea.vmem %s5, %s344
        %p346 = pneg %p183
        %p347 = pneg %p180
        %p348 = pneg %p209
        %p349 = pneg %p206
        %s350 = smul.u32 2, %s24
        %p351 = scmp.lt.s32.totalorder %s350, 1
        %s352 = scalar_select %p351, %s350, 1
        %s353 = smul.addr %s352, 8
        %s354 = scalar_lea.vmem %s6, %s353
        %s355 = smul.u32 2, %s24
        %p356 = scmp.lt.s32.totalorder %s355, 1
        %s357 = scalar_select %p356, %s355, 1
        %s358 = smul.addr %s357, 8
        %s359 = scalar_lea.vmem %s0, %s358
        %s360 = smul.u32 2, %s24
        %s361 = smul.u32 2, %s24
        %p362 = scmp.lt.s32.totalorder %s361, 1
        %s363 = scalar_select %p362, %s361, 1
        %s364 = smul.addr %s363, 8
        %s365 = scalar_lea.vmem %s1, %s364
        %s366 = smul.u32 2, %s24
        %s367 = smul.u32 2, %s24
        %p368 = scmp.lt.s32.totalorder %s367, 1
        %s369 = scalar_select %p368, %s367, 1
        %s370 = smul.addr %s369, 8
        %s371 = scalar_lea.vmem %s2, %s370
        %s372 = smul.u32 2, %s24
        %s373 = smul.u32 32, %s25
        %s374 = smul.u32 2, %s25
        %p375 = scmp.lt.s32.totalorder %s374, 5
        %s376 = scalar_select %p375, %s374, 5
        %s377 = scalar_lea.vmem %s4, %s376
        %s378 = smul.u32 2, %s25
        %s379 = smul.u32 2, %s25
        %p380 = scmp.lt.s32.totalorder %s379, 5
        %s381 = scalar_select %p380, %s379, 5
        %s382 = scalar_lea.vmem %s5, %s381
        %s383 = smul.u32 2, %s25
        %s384 = smul.u32 2, %s24
        %p385 = scmp.lt.s32.totalorder %s384, 1
        %s386 = scalar_select %p385, %s384, 1
        %s387 = smul.addr %s386, 8
        %s388 = scalar_lea.vmem %s6, %s387
        %s389 = smul.u32 2, %s24
        %p390 = scmp.eq.s32.totalorder %s25, 0
        // Predicated region
        $region49: #{tpu_custom_call.1} parent=43 // pred_check
          %p391 = pneg %p390
        $region50: #{tpu_custom_call.1} parent=43 // pred_check_branch
          %393 = sbr.rel (%p391) target = $region52
        $region51: #{tpu_custom_call.1} parent=43 // pred_region
          %vm394 = vcmask 7168
          %395 = vst.msk [vmem:[#allocation2] sm:$0xff] %vm394, -inf
          %396 = vst.msk [vmem:[#allocation2 + $0x8] sm:$0xff] %vm394, -inf
          %397 = vst.msk [vmem:[#allocation3] sm:$0xff] %vm394, 0.0
          %398 = vst.msk [vmem:[#allocation3 + $0x8] sm:$0xff] %vm394, 0.0
          %399 = vst.msk [vmem:[#allocation4] sm:$0xff] %vm394, 0.0
          %400 = vst.msk [vmem:[#allocation4 + $0x8] sm:$0xff] %vm394, 0.0
        $region52: #{tpu_custom_call.1} parent=43 // pred_fallthru
          _
        %v401 = vld [vmem:[%s365] sm:$0xff]
        %v402 = vld [vmem:[%s365 + $0x8] sm:$0xff]
        %v403 = vld [vmem:[%s303] sm:$0xff]
        %v404 = vld [vmem:[%s303 + $0x8] sm:$0xff]
        %v405 = vld [vmem:[%s303 + $0x10] sm:$0xff]
        %v406 = vld [vmem:[%s303 + $0x18] sm:$0xff]
        %v407 = vld [vmem:[%s303 + $0x20] sm:$0xff]
        %v408 = vld [vmem:[%s303 + $0x28] sm:$0xff]
        %v409 = vld [vmem:[%s303 + $0x30] sm:$0xff]
        %v410 = vld [vmem:[%s303 + $0x38] sm:$0xff]
        %v411 = vld [vmem:[%s303 + $0x40] sm:$0xff]
        %v412 = vld [vmem:[%s303 + $0x48] sm:$0xff]
        %v413 = vld [vmem:[%s303 + $0x50] sm:$0xff]
        %v414 = vld [vmem:[%s303 + $0x58] sm:$0xff]
        %v415 = vld [vmem:[%s303 + $0x60] sm:$0xff]
        %v416 = vld [vmem:[%s303 + $0x68] sm:$0xff]
        %v417 = vld [vmem:[%s303 + $0x70] sm:$0xff]
        %v418 = vld [vmem:[%s303 + $0x78] sm:$0xff]
        %v419 = vld [vmem:[%s303 + $0x80] sm:$0xff]
        %v420 = vld [vmem:[%s303 + $0x88] sm:$0xff]
        %v421 = vld [vmem:[%s303 + $0x90] sm:$0xff]
        %v422 = vld [vmem:[%s303 + $0x98] sm:$0xff]
        %v423 = vld [vmem:[%s303 + $0xa0] sm:$0xff]
        %v424 = vld [vmem:[%s303 + $0xa8] sm:$0xff]
        %v425 = vld [vmem:[%s303 + $0xb0] sm:$0xff]
        %v426 = vld [vmem:[%s303 + $0xb8] sm:$0xff]
        %v427 = vld [vmem:[%s303 + $0xc0] sm:$0xff]
        %v428 = vld [vmem:[%s303 + $0xc8] sm:$0xff]
        %v429 = vld [vmem:[%s303 + $0xd0] sm:$0xff]
        %v430 = vld [vmem:[%s303 + $0xd8] sm:$0xff]
        %v431 = vld [vmem:[%s303 + $0xe0] sm:$0xff]
        %v432 = vld [vmem:[%s303 + $0xe8] sm:$0xff]
        %v433 = vld [vmem:[%s303 + $0xf0] sm:$0xff]
        %v434 = vld [vmem:[%s303 + $0xf8] sm:$0xff]
        %435 = vmatprep.subr.mxu0 0.0
        %436 = vmatpush1.xpose.msra.mxu0 %v403
        %437 = vmatprep.subr.mxu0 0.0
        %438 = vmatpush1.xpose.msra.mxu0 %v404
        %439 = vmatprep.subr.mxu0 0.0
        %440 = vmatpush1.xpose.msra.mxu0 %v405
        %441 = vmatprep.subr.mxu0 0.0
        %442 = vmatpush1.xpose.msra.mxu0 %v406
        %443 = vmatprep.subr.mxu0 0.0
        %444 = vmatpush1.xpose.msra.mxu0 %v407
        %445 = vmatprep.subr.mxu0 0.0
        %446 = vmatpush1.xpose.msra.mxu0 %v408
        %447 = vmatprep.subr.mxu0 0.0
        %448 = vmatpush1.xpose.msra.mxu0 %v409
        %449 = vmatprep.subr.mxu0 0.0
        %450 = vmatpush1.xpose.msra.mxu0 %v410
        %451 = vmatprep.subr.mxu0 0.0
        %452 = vmatpush1.xpose.msra.mxu0 %v411
        %453 = vmatprep.subr.mxu0 0.0
        %454 = vmatpush1.xpose.msra.mxu0 %v412
        %455 = vmatprep.subr.mxu0 0.0
        %456 = vmatpush1.xpose.msra.mxu0 %v413
        %457 = vmatprep.subr.mxu0 0.0
        %458 = vmatpush1.xpose.msra.mxu0 %v414
        %459 = vmatprep.subr.mxu0 0.0
        %460 = vmatpush1.xpose.msra.mxu0 %v415
        %461 = vmatprep.subr.mxu0 0.0
        %462 = vmatpush1.xpose.msra.mxu0 %v416
        %463 = vmatprep.subr.mxu0 0.0
        %464 = vmatpush1.xpose.msra.mxu0 %v417
        %465 = vmatprep.subr.mxu0 0.0
        %466 = vmatpush1.xpose.msra.mxu0 %v418
        %467 = vmatprep.subr.mxu0 0.0
        %468 = vmatpush1.xpose.msra.mxu0 %v419
        %469 = vmatprep.subr.mxu0 0.0
        %470 = vmatpush1.xpose.msra.mxu0 %v420
        %471 = vmatprep.subr.mxu0 0.0
        %472 = vmatpush1.xpose.msra.mxu0 %v421
        %473 = vmatprep.subr.mxu0 0.0
        %474 = vmatpush1.xpose.msra.mxu0 %v422
        %475 = vmatprep.subr.mxu0 0.0
        %476 = vmatpush1.xpose.msra.mxu0 %v423
        %477 = vmatprep.subr.mxu0 0.0
        %478 = vmatpush1.xpose.msra.mxu0 %v424
        %479 = vmatprep.subr.mxu0 0.0
        %480 = vmatpush1.xpose.msra.mxu0 %v425
        %481 = vmatprep.subr.mxu0 0.0
        %482 = vmatpush1.xpose.msra.mxu0 %v426
        %483 = vmatprep.subr.mxu0 0.0
        %484 = vmatpush1.xpose.msra.mxu0 %v427
        %485 = vmatprep.subr.mxu0 0.0
        %486 = vmatpush1.xpose.msra.mxu0 %v428
        %487 = vmatprep.subr.mxu0 0.0
        %488 = vmatpush1.xpose.msra.mxu0 %v429
        %489 = vmatprep.subr.mxu0 0.0
        %490 = vmatpush1.xpose.msra.mxu0 %v430
        %491 = vmatprep.subr.mxu0 0.0
        %492 = vmatpush1.xpose.msra.mxu0 %v431
        %493 = vmatprep.subr.mxu0 0.0
        %494 = vmatpush1.xpose.msra.mxu0 %v432
        %495 = vmatprep.subr.mxu0 0.0
        %496 = vmatpush1.xpose.msra.mxu0 %v433
        %497 = vmatprep.subr.mxu0 0.0
        %498 = vmatpush1.xpose.msra.mxu0 %v434
        %499 = vmatprep.mubr.f32.mxu0 0.0
        %500 = vmatmul.mubr.f32.gmra.mrb[0].mxu0 %v401
        %v501 = vpop.f32.mrb[0].mxu0
        %v502 = vadd.f32 0.0, %v501
        %v503 = vpop.f32.mrb[0].mxu0
        %v504 = vadd.f32 0.0, %v503
        %505 = vmatprep.mubr.f32.mxu0 0.0
        %506 = vmatmul.mubr.f32.gmra.mrb[0].mxu0 %v402
        %v507 = vpop.f32.mrb[0].mxu0
        %v508 = vadd.f32 0.0, %v507
        %v509 = vpop.f32.mrb[0].mxu0
        %v510 = vadd.f32 0.0, %v509
        %511 = vdwg.mxu0
        %v512 = vld [vmem:[%s371] sm:$0xff]
        %v513 = vld [vmem:[%s371 + $0x8] sm:$0xff]
        %515 = vset.pattern.permute.xlu0 0
        %516 = vperm.xlu0 %515, %v512
        %v517 = vpop.permute.xlu0 %516
        %520 = vset.pattern.permute.xlu0 0
        %521 = vperm.xlu0 %520, %v513
        %v522 = vpop.permute.xlu0 %521
        %v524 = vmul.f32 %v502, %v517
        %v525 = vmul.f32 %v504, %v517
        %v526 = vmul.f32 %v508, %v522
        %v527 = vmul.f32 %v510, %v522
        %v528 = vld [vmem:[%s377] sm:$0x3]
        %v530 = vlaneseq
        %v531 = vshrl.u32 %v530, 7
        %v532 = vsub.s32 0, %v531
        %v533 = vrot.slane %v528, %v532
        %v534 = vlaneseq
        %v535 = vshrl.u32 %v534, 7
        %v536 = vsub.s32 1, %v535
        %v537 = vrot.slane %v528, %v536
        %v540 = vmul.f32 %v524, %v533
        %v541 = vmul.f32 %v525, %v537
        %v542 = vmul.f32 %v526, %v533
        %v543 = vmul.f32 %v527, %v537
        %v544 = vmul.f32 %v540, 30.0
        %v545 = vmul.f32 %v541, 30.0
        %v546 = vmul.f32 %v542, 30.0
        %v547 = vmul.f32 %v543, 30.0
        %v548 = vld [vmem:[%s382] sm:$0x3]
        %v550 = vlaneseq
        %v551 = vshrl.u32 %v550, 7
        %v552 = vsub.s32 0, %v551
        %v553 = vrot.slane %v548, %v552
        %v554 = vlaneseq
        %v555 = vshrl.u32 %v554, 7
        %v556 = vsub.s32 1, %v555
        %v557 = vrot.slane %v548, %v556
        %v560 = vadd.f32 %v544, %v553
        %v561 = vadd.f32 %v545, %v557
        %v562 = vadd.f32 %v546, %v553
        %v563 = vadd.f32 %v547, %v557
        %v564 = vld [vmem:[%s359] sm:$0xff]
        %v565 = vld [vmem:[%s359 + $0x8] sm:$0xff]
        %v566 = vlaneseq
        %v567 = vand.u32 %v566, 127
        %v568 = vadd.s32 %v567, 128
        %s569 = smul.u32 %s25, 256
        %v570 = vstv %s569
        %v571 = vadd.s32 %v567, %v570
        %v572 = vadd.s32 %v568, %v570
        %573 = vset.pattern.permute.xlu0 0
        %574 = vperm.xlu0 %573, %v564
        %v575 = vpop.permute.xlu0 %574
        %576 = vset.pattern.permute.xlu0 0
        %577 = vperm.xlu0 %576, %v565
        %v578 = vpop.permute.xlu0 %577
        %vm579 = vcmp.eq.s32.totalorder %v571, %v575
        %vm580 = vcmp.eq.s32.totalorder %v572, %v575
        %vm581 = vcmp.eq.s32.totalorder %v571, %v578
        %vm582 = vcmp.eq.s32.totalorder %v572, %v578
        %v583 = vld [vmem:[#allocation4] sm:$0xff]
        %v584 = vld [vmem:[#allocation4 + $0x8] sm:$0xff]
        %v585 = vsel %vm579, %v540, 0.0
        %v586 = vsel %vm580, %v541, 0.0
        %v587 = vsel %vm581, %v542, 0.0
        %v588 = vsel %vm582, %v543, 0.0
        %v589 = vadd.f32 %v585, %v586
        %590 = vadd.xlane.f32.xlu0 %v589
        %v591 = vpop.xlane.xlu0 %590
        %v592 = vadd.f32 %v587, %v588
        %593 = vadd.xlane.f32.xlu0 %v592
        %v594 = vpop.xlane.xlu0 %593
        %v595 = vadd.f32 %v583, %v591
        %v596 = vadd.f32 %v584, %v594
        %vm597 = vcmask 7168
        %598 = vst.msk [vmem:[#allocation4] sm:$0xff] %vm597, %v595
        %599 = vst.msk [vmem:[#allocation4 + $0x8] sm:$0xff] %vm597, %v596
        %v600 = vld [vmem:[#allocation2] sm:$0xff]
        %v601 = vld [vmem:[#allocation2 + $0x8] sm:$0xff]
        %v602 = vmax.f32 %v560, %v561
        %603 = vmax.xlane.f32.xlu0 %v602
        %v604 = vpop.xlane.xlu0 %603
        %v605 = vmax.f32 %v562, %v563
        %606 = vmax.xlane.f32.xlu0 %v605
        %v607 = vpop.xlane.xlu0 %606
        %v608 = vmax.f32 %v600, %v604
        %v609 = vmax.f32 %v601, %v607
        %v610 = vsub.f32 %v600, %v608
        %v611 = vsub.f32 %v601, %v609
        %v612 = vmul.f32 %v610, 1.442695
        %v613 = vpow.pop %v612
        %v614 = vmul.f32 %v611, 1.442695
        %v615 = vpow.pop %v614
        %v616 = vld [vmem:[#allocation3] sm:$0xff]
        %v617 = vld [vmem:[#allocation3 + $0x8] sm:$0xff]
        %v618 = vmul.f32 %v613, %v616
        %v619 = vmul.f32 %v615, %v617
        %621 = vset.pattern.permute.xlu0 0
        %622 = vperm.xlu0 %621, %v608
        %v623 = vpop.permute.xlu0 %622
        %626 = vset.pattern.permute.xlu0 0
        %627 = vperm.xlu0 %626, %v609
        %v628 = vpop.permute.xlu0 %627
        %v630 = vsub.f32 %v560, %v623
        %v631 = vsub.f32 %v561, %v623
        %v632 = vsub.f32 %v562, %v628
        %v633 = vsub.f32 %v563, %v628
        %v634 = vmul.f32 %v630, 1.442695
        %v635 = vpow.pop %v634
        %v636 = vmul.f32 %v631, 1.442695
        %v637 = vpow.pop %v636
        %v638 = vmul.f32 %v632, 1.442695
        %v639 = vpow.pop %v638
        %v640 = vmul.f32 %v633, 1.442695
        %v641 = vpow.pop %v640
        %v642 = vadd.f32 %v635, %v637
        %643 = vadd.xlane.f32.xlu0 %v642
        %v644 = vpop.xlane.xlu0 %643
        %v645 = vadd.f32 %v639, %v641
        %646 = vadd.xlane.f32.xlu0 %v645
        %v647 = vpop.xlane.xlu0 %646
        %v648 = vadd.f32 %v618, %v644
        %v649 = vadd.f32 %v619, %v647
        %650 = vst.msk [vmem:[#allocation3] sm:$0xff] %vm597, %v648
        %651 = vst.msk [vmem:[#allocation3 + $0x8] sm:$0xff] %vm597, %v649
        %652 = vst.msk [vmem:[#allocation2] sm:$0xff] %vm597, %v608
        %653 = vst.msk [vmem:[#allocation2 + $0x8] sm:$0xff] %vm597, %v609
        %p654 = scmp.eq.s32.totalorder %s25, 2
        // Predicated region
        $region53: #{tpu_custom_call.1} parent=43 // pred_check
          %p655 = pneg %p654
        $region54: #{tpu_custom_call.1} parent=43 // pred_check_branch
          %657 = sbr.rel (%p655) target = $region56
        $region55: #{tpu_custom_call.1} parent=43 // pred_region
          %v658 = vld [vmem:[#allocation4] sm:$0xff]
          %v659 = vld [vmem:[#allocation4 + $0x8] sm:$0xff]
          %v660 = vmul.f32 %v658, %v658
          %v661 = vmul.f32 %v659, %v659
          %v662 = vsub.f32 1.0, %v660
          %v663 = vsub.f32 1.0, %v661
          %v664 = vmax.f32 %v662, 0.0
          %v665 = vmax.f32 %v663, 0.0
          %v666 = vmin.f32 %v664, 1.0
          %v667 = vmin.f32 %v665, 1.0
          %v668 = vrsqrt.pop %v666
          %v669 = vmul.f32 %v666, %v668
          %vm670 = vcmp.eq.f32.partialorder %v666, inf
          %v671 = vsel %vm670, %v666, %v669
          %vm672 = vcmp.eq.f32.partialorder %v666, 0.0
          %v673 = vand.u32 %v666, 2147483648
          %v674 = vsel %vm672, %v673, %v671
          %v675 = vrsqrt.pop %v667
          %v676 = vmul.f32 %v667, %v675
          %vm677 = vcmp.eq.f32.partialorder %v667, inf
          %v678 = vsel %vm677, %v667, %v676
          %vm679 = vcmp.eq.f32.partialorder %v667, 0.0
          %v680 = vand.u32 %v667, 2147483648
          %v681 = vsel %vm679, %v680, %v678
          %v682 = vmul.f32 %v658, 0.87758255
          %v683 = vmul.f32 %v659, 0.87758255
          %v684 = vmul.f32 %v674, 0.47942555
          %v685 = vmul.f32 %v681, 0.47942555
          %v686 = vsub.f32 %v682, %v684
          %v687 = vsub.f32 %v683, %v685
          %vm688 = vcmp.gt.f32.partialorder %v658, -0.87758255
          %vm689 = vcmp.gt.f32.partialorder %v659, -0.87758255
          %v690 = vsub.f32 %v658, 0.23971277
          %v691 = vsub.f32 %v659, 0.23971277
          %v692 = vsel %vm688, %v686, %v690
          %v693 = vsel %vm689, %v687, %v691
          %v694 = vld [vmem:[#allocation2] sm:$0xff]
          %v695 = vld [vmem:[#allocation2 + $0x8] sm:$0xff]
          %v696 = vld [vmem:[#allocation3] sm:$0xff]
          %v697 = vld [vmem:[#allocation3 + $0x8] sm:$0xff]
          %v698 = vmul.f32 %v692, 30.0
          %v699 = vmul.f32 %v693, 30.0
          %v700 = vsub.f32 %v698, %v694
          %v701 = vsub.f32 %v699, %v695
          %v702 = vmul.f32 %v700, 1.442695
          %v703 = vpow.pop %v702
          %v704 = vmul.f32 %v701, 1.442695
          %v705 = vpow.pop %v704
          %v706 = vadd.f32 %v696, %v703
          %v707 = vadd.f32 %v697, %v705
          %v708 = vmul.f32 %v658, 30.0
          %v709 = vmul.f32 %v659, 30.0
          %v710 = vsub.f32 %v708, %v694
          %v711 = vsub.f32 %v709, %v695
          %v712 = vmul.f32 %v710, 1.442695
          %v713 = vpow.pop %v712
          %v714 = vmul.f32 %v711, 1.442695
          %v715 = vpow.pop %v714
          %v716 = vsub.f32 %v706, %v713
          %v717 = vsub.f32 %v707, %v715
          %v718 = vlog2.pop %v716
          %v719 = vmul.f32 %v718, 0.6931472
          %v720 = vlog2.pop %v717
          %v721 = vmul.f32 %v720, 0.6931472
          %v722 = vadd.f32 %v694, %v719
          %v723 = vadd.f32 %v695, %v721
          %v724 = vsub.f32 %v722, %v698
          %v725 = vsub.f32 %v723, %v699
          %726 = vst.msk [vmem:[%s388] sm:$0xff] %vm597, %v724
          %727 = vst.msk [vmem:[%s388 + $0x8] sm:$0xff] %vm597, %v725
        $region56: #{tpu_custom_call.1} parent=43 // pred_fallthru
          _
        %s728 = smul.u32 2, %s24
        %p729 = scmp.lt.s32.totalorder %s728, 1
        %s730 = scalar_select %p729, %s728, 1
        %s731 = smul.addr %s730, 8
        %s732 = scalar_lea.vmem %s6, %s731
        // Predicated region
        $region57: #{tpu_custom_call.1} parent=43 // pred_check
          %p733 = pneg %p206
        $region58: #{tpu_custom_call.1} parent=43 // pred_check_branch
          %735 = sbr.rel (%p733) target = $region60
        $region59: #{tpu_custom_call.1} parent=43 // pred_region
          %s736 = smul.u32 2, %s24
        $region60: #{tpu_custom_call.1} parent=43 // pred_fallthru
          _
        // Predicated region
        $region61: #{tpu_custom_call.1} parent=43 // pred_check
          %p737 = pneg %p206
        $region62: #{tpu_custom_call.1} parent=43 // pred_check_branch
          %739 = sbr.rel (%p737) target = $region64
        $region63: #{tpu_custom_call.1} parent=43 // pred_region
          %s740 = smul.u32 2, %s24
          %p741 = scmp.lt.s32.totalorder %s740, 1
          %s742 = scalar_select %p741, %s740, 1
          %s743 = smul.addr %s742, 8
          %s744 = scalar_lea.vmem %s6, %s743
        $region64: #{tpu_custom_call.1} parent=43 // pred_fallthru
          _
      $region44: #{tpu_custom_call.1} parent=5 // pred_fallthru
        _
      %p745 = scmp.le.s32.totalorder 2, %s15
      // Predicated region
      $region65: #{tpu_custom_call.1} parent=5 // pred_check
        %p746 = pneg %p745
      $region66: #{tpu_custom_call.1} parent=5 // pred_check_branch
        %748 = sbr.rel (%p746) target = $region68
      $region67: #{tpu_custom_call.1} parent=5 // pred_region
        %s749 = ssub.s32 %s15, 2
      $region68: #{tpu_custom_call.1} parent=5 // pred_fallthru
        _
    $region6: #{tpu_custom_call.1} parent=1 // loop_footer
      %s19 = sadd.s32 1, %s15
    $region7: #{tpu_custom_call.1} parent=1 // loop_footer_branch
      %14 = sbr.rel target = $region3
    $region8: #{tpu_custom_call.1} parent=1 // loop_exit
      _
    %750 = vsyncpa [#allocation6], 1
    %s751 = scalar_lea.sflag [#allocation6], 1
    %752 = vsyncpa %s751, 1

</llo_original>
